<compile_context>
chip_gen: v7x
topology: tpu7x:2x2x1
jax: 0.10.0
libtpu: 0.0.40
codegen_flags: <defaults>
</compile_context>

<pallas_src>
import jax
import jax.numpy as jnp
from jax.experimental import pallas as pl
from jax.experimental.pallas import tpu as pltpu

D_IN, H1, H2, D_OUT = 12, 128, 128, 64
BN_EPS = 1e-5


def _round_up(v, m):
    return ((v + m - 1) // m) * m


# ----------------------------------------------------------------------------
# Kernel: one batch tile through the whole 3-layer MLP (BN/bias pre-folded).
# ----------------------------------------------------------------------------
def _mlp_kernel(x_ref,
                w1_ref, b1_ref,
                w2_ref, b2_ref,
                w3_ref, b3_ref,
                o_ref):
    # Layer 1: bf16 matmul (x already bf16), f32 accumulate, f32 bias + ReLU
    h = jnp.dot(x_ref[...], w1_ref[...], preferred_element_type=jnp.float32)
    h = jnp.maximum(h + b1_ref[...], 0.0)
    # Dropout(p=0.5) is identity in eval mode.

    # Layer 2
    h = jnp.dot(h.astype(jnp.bfloat16), w2_ref[...],
                preferred_element_type=jnp.float32)
    h = jnp.maximum(h + b2_ref[...], 0.0)
    # Dropout(p=0.8) is identity in eval mode.

    # Layer 3 (64-wide output; block width equals the full array width)
    h = jnp.dot(h.astype(jnp.bfloat16), w3_ref[...],
                preferred_element_type=jnp.float32)
    h = jnp.maximum(h + b3_ref[...], 0.0)

    o_ref[...] = h.astype(o_ref.dtype)


# ----------------------------------------------------------------------------
# Wrapper
# ----------------------------------------------------------------------------
def feat_l_prad_forward(x, kernel_params, *, max_block_b=1024):
    """x: (B, 12) float32.  Returns (B, 64) float32."""
    B = x.shape[0]
    (w1, b1, w2, b2, w3, b3) = kernel_params

    # Batch tile selection:
    #  - small B: pad only to a multiple of 8 (no 32x redundant work at B=8)
    #  - large B: up to 1024 rows per step (amortizes ~0.35us/step overhead and
    #    the MXU weight pushes), but keep >= 2 programs when B > 256 so the
    #    "parallel" grid axis can use both TensorCores on v7x.
    if B <= 256:
        block_b = max(_round_up(B, 8), 8)
    else:
        block_b = min(max_block_b, _round_up(pl.cdiv(B, 2), 256))

    n_blocks = pl.cdiv(B, block_b)
    Bp = n_blocks * block_b

    # Cast x to bf16 on the host side of the call (halves x DMA bytes).
    xb = x.astype(jnp.bfloat16)
    if Bp != B:
        xb = jnp.pad(xb, ((0, Bp - B), (0, 0)))

    def row_spec(feat):
        return pl.BlockSpec((block_b, feat), lambda i: (i, 0))

    def full_spec(r, c):
        return pl.BlockSpec((r, c), lambda i: (0, 0))

    flops = 2 * Bp * (D_IN * H1 + H1 * H2 + H2 * D_OUT)
    bytes_accessed = (
        Bp * D_IN * 2 + Bp * D_OUT * 4                      # x in (bf16), out (f32)
        + (D_IN * H1 + H1 * H2 + H2 * D_OUT) * 2            # bf16 weights
        + (H1 + H2 + D_OUT) * 4                             # f32 folded biases
    )

    out = pl.pallas_call(
        _mlp_kernel,
        out_shape=jax.ShapeDtypeStruct((Bp, D_OUT), jnp.float32),
        grid_spec=pltpu.PrefetchScalarGridSpec(
            num_scalar_prefetch=0,
            grid=(n_blocks,),
            in_specs=[
                row_spec(D_IN),                  # x tile (bf16)   (block_b, 12)
                full_spec(D_IN, H1),             # w1 (bf16)       (12, 128)
                full_spec(1, H1),                # b1 (f32, folded)
                full_spec(H1, H2),               # w2 (bf16)       (128, 128)
                full_spec(1, H2),                # b2 (f32, folded)
                full_spec(H2, D_OUT),            # w3 (bf16)       (128, 64)
                full_spec(1, D_OUT),             # b3 (f32, folded)
            ],
            out_specs=pl.BlockSpec((block_b, D_OUT), lambda i: (i, 0)),
        ),
        compiler_params=pltpu.CompilerParams(
            dimension_semantics=("parallel",)),
        cost_estimate=pl.CostEstimate(
            flops=flops, transcendentals=0, bytes_accessed=bytes_accessed),
    )(xb, w1, b1, w2, b2, w3, b3)

    return out if Bp == B else out[:B]


# ----------------------------------------------------------------------------
# Parameter construction (matches PyTorch defaults) + host-side folding
# ----------------------------------------------------------------------------
def _xavier_uniform(key, fan_in, fan_out):
    # torch.nn.init.xavier_uniform_ bound; stored as (fan_in, fan_out) so the
    # kernel computes x @ W (equivalent to torch's x @ W.T with W:(out,in)).
    bound = (6.0 / (fan_in + fan_out)) ** 0.5
    return jax.random.uniform(key, (fan_in, fan_out), jnp.float32, -bound, bound)


def make_raw_params(key):
    k1, k2, k3, kb1, kb2, kb3 = jax.random.split(key, 6)

    w1 = _xavier_uniform(k1, D_IN, H1)
    w2 = _xavier_uniform(k2, H1, H2)
    w3 = _xavier_uniform(k3, H2, D_OUT)

    # nn.Linear bias default init: U(-1/sqrt(fan_in), 1/sqrt(fan_in))
    b1 = jax.random.uniform(kb1, (1, H1), jnp.float32,
                            -1.0 / D_IN ** 0.5, 1.0 / D_IN ** 0.5)
    b2 = jax.random.uniform(kb2, (1, H2), jnp.float32,
                            -1.0 / H1 ** 0.5, 1.0 / H1 ** 0.5)
    b3 = jax.random.uniform(kb3, (1, D_OUT), jnp.float32,
                            -1.0 / H2 ** 0.5, 1.0 / H2 ** 0.5)

    # BatchNorm1d eval-mode, default params/stats:
    #   gamma=1, beta=0, running_mean=0, running_var=1
    #   scale = gamma / sqrt(var + eps), shift = beta - mean * scale
    def bn_affine(n):
        scale = jnp.full((1, n), 1.0 / (1.0 + BN_EPS) ** 0.5, jnp.float32)
        shift = jnp.zeros((1, n), jnp.float32)
        return scale, shift

    s1, t1 = bn_affine(H1)
    s2, t2 = bn_affine(H2)
    s3, t3 = bn_affine(D_OUT)

    return (w1, b1, s1, t1, w2, b2, s2, t2, w3, b3, s3, t3)


def fold_params(raw):
    """Fold BN affine + Linear bias into (w', b'); cast weights to bf16."""
    (w1, b1, s1, t1, w2, b2, s2, t2, w3, b3, s3, t3) = raw

    def fold(w, b, s, t):
        wf = (w * s).astype(jnp.bfloat16)          # scale broadcast over out cols
        bf = (b * s + t).astype(jnp.float32)
        return wf, bf

    w1f, b1f = fold(w1, b1, s1, t1)
    w2f, b2f = fold(w2, b2, s2, t2)
    w3f, b3f = fold(w3, b3, s3, t3)

    return (w1f, b1f, w2f, b2f, w3f, b3f)


def _reference(x, raw):
    """Pure-JAX f32 reference of the eval-mode PyTorch forward."""
    (w1, b1, s1, t1, w2, b2, s2, t2, w3, b3, s3, t3) = raw
    h = jnp.maximum((x @ w1 + b1) * s1 + t1, 0.0)
    h = jnp.maximum((h @ w2 + b2) * s2 + t2, 0.0)
    h = jnp.maximum((h @ w3 + b3) * s3 + t3, 0.0)
    return h


if __name__ == "__main__":
    key = jax.random.PRNGKey(0)
    kx, kx2, kp = jax.random.split(key, 3)

    raw = make_raw_params(kp)
    kernel_params = fold_params(raw)

    # Small-batch path (single program, batch padded only to a multiple of 8)
    B = 8
    x = jax.random.normal(kx, (B, D_IN), jnp.float32)
    out = jax.block_until_ready(feat_l_prad_forward(x, kernel_params))
    ref = _reference(x, raw)
    assert out.shape == (B, D_OUT)
    assert jnp.allclose(out, ref, atol=2e-2, rtol=2e-2), (
        float(jnp.max(jnp.abs(out - ref))))

    # Multi-program path (B > 256 -> >= 2 grid programs, padded batch rows)
    B2 = 300
    x2 = jax.random.normal(kx2, (B2, D_IN), jnp.float32)
    out2 = jax.block_until_ready(feat_l_prad_forward(x2, kernel_params))
    ref2 = _reference(x2, raw)
    assert out2.shape == (B2, D_OUT)
    assert jnp.allclose(out2, ref2, atol=2e-2, rtol=2e-2), (
        float(jnp.max(jnp.abs(out2 - ref2))))

    print("KERNEL_OK")
</pallas_src>

<mosaic_0001>
module attributes {stable_mosaic.version = 11 : i64} {
  func.func @_mlp_kernel(%arg0: i32, %arg1: memref<8x12xbf16, #tpu.memory_space<vmem>>, %arg2: memref<12x128xbf16, #tpu.memory_space<vmem>>, %arg3: memref<1x128xf32, #tpu.memory_space<vmem>>, %arg4: memref<128x128xbf16, #tpu.memory_space<vmem>>, %arg5: memref<1x128xf32, #tpu.memory_space<vmem>>, %arg6: memref<128x64xbf16, #tpu.memory_space<vmem>>, %arg7: memref<1x64xf32, #tpu.memory_space<vmem>>, %arg8: memref<8x64xf32, #tpu.memory_space<vmem>>) attributes {dimension_semantics = [#tpu.dimension_semantics<parallel>], iteration_bounds = array<i64: 1>, scalar_prefetch = 0 : i64, scratch_operands = 0 : i64, tpu.core_type = #tpu.core_type<tc>, window_params = [{transform_indices = @transform_0, window_bounds = array<i64: 8, 12>}, {pipeline_mode = #tpu.pipeline_mode<synchronous>, transform_indices = @transform_1, window_bounds = array<i64: 12, 128>}, {pipeline_mode = #tpu.pipeline_mode<synchronous>, transform_indices = @transform_2, window_bounds = array<i64: 1, 128>}, {pipeline_mode = #tpu.pipeline_mode<synchronous>, transform_indices = @transform_3, window_bounds = array<i64: 128, 128>}, {pipeline_mode = #tpu.pipeline_mode<synchronous>, transform_indices = @transform_4, window_bounds = array<i64: 1, 128>}, {pipeline_mode = #tpu.pipeline_mode<synchronous>, transform_indices = @transform_5, window_bounds = array<i64: 128, 64>}, {pipeline_mode = #tpu.pipeline_mode<synchronous>, transform_indices = @transform_6, window_bounds = array<i64: 1, 64>}, {transform_indices = @transform_7, window_bounds = array<i64: 8, 64>}]} {
    %c0 = arith.constant 0 : index
    %c0_0 = arith.constant 0 : index
    %0 = vector.load %arg1[%c0, %c0_0] : memref<8x12xbf16, #tpu.memory_space<vmem>>, vector<8x12xbf16>
    %c0_1 = arith.constant 0 : index
    %c0_2 = arith.constant 0 : index
    %1 = vector.load %arg2[%c0_1, %c0_2] : memref<12x128xbf16, #tpu.memory_space<vmem>>, vector<12x128xbf16>
    %cst = arith.constant dense<0.000000e+00> : vector<8x128xf32>
    %2 = tpu.matmul %0, %1, %cst {dimension_numbers = #tpu.dot_dimension_numbers<[1], [0], [0], [1], [0, 0, 1, 1], [], []>} : vector<8x12xbf16>, vector<12x128xbf16>, vector<8x128xf32> -> vector<8x128xf32>
    %c0_3 = arith.constant 0 : index
    %c0_4 = arith.constant 0 : index
    %3 = vector.load %arg3[%c0_3, %c0_4] : memref<1x128xf32, #tpu.memory_space<vmem>>, vector<1x128xf32>
    %4 = vector.broadcast %3 : vector<1x128xf32> to vector<8x128xf32>
    %5 = arith.addf %2, %4 : vector<8x128xf32>
    %cst_5 = arith.constant 0.000000e+00 : f32
    %6 = vector.broadcast %cst_5 : f32 to vector<8x128xf32>
    %7 = arith.maximumf %5, %6 : vector<8x128xf32>
    %8 = arith.truncf %7 : vector<8x128xf32> to vector<8x128xbf16>
    %c0_6 = arith.constant 0 : index
    %c0_7 = arith.constant 0 : index
    %9 = vector.load %arg4[%c0_6, %c0_7] : memref<128x128xbf16, #tpu.memory_space<vmem>>, vector<128x128xbf16>
    %cst_8 = arith.constant dense<0.000000e+00> : vector<8x128xf32>
    %10 = tpu.matmul %8, %9, %cst_8 {dimension_numbers = #tpu.dot_dimension_numbers<[1], [0], [0], [1], [0, 0, 1, 1], [], []>} : vector<8x128xbf16>, vector<128x128xbf16>, vector<8x128xf32> -> vector<8x128xf32>
    %c0_9 = arith.constant 0 : index
    %c0_10 = arith.constant 0 : index
    %11 = vector.load %arg5[%c0_9, %c0_10] : memref<1x128xf32, #tpu.memory_space<vmem>>, vector<1x128xf32>
    %12 = vector.broadcast %11 : vector<1x128xf32> to vector<8x128xf32>
    %13 = arith.addf %10, %12 : vector<8x128xf32>
    %cst_11 = arith.constant 0.000000e+00 : f32
    %14 = vector.broadcast %cst_11 : f32 to vector<8x128xf32>
    %15 = arith.maximumf %13, %14 : vector<8x128xf32>
    %16 = arith.truncf %15 : vector<8x128xf32> to vector<8x128xbf16>
    %c0_12 = arith.constant 0 : index
    %c0_13 = arith.constant 0 : index
    %17 = vector.load %arg6[%c0_12, %c0_13] : memref<128x64xbf16, #tpu.memory_space<vmem>>, vector<128x64xbf16>
    %cst_14 = arith.constant dense<0.000000e+00> : vector<8x64xf32>
    %18 = tpu.matmul %16, %17, %cst_14 {dimension_numbers = #tpu.dot_dimension_numbers<[1], [0], [0], [1], [0, 0, 1, 1], [], []>} : vector<8x128xbf16>, vector<128x64xbf16>, vector<8x64xf32> -> vector<8x64xf32>
    %c0_15 = arith.constant 0 : index
    %c0_16 = arith.constant 0 : index
    %19 = vector.load %arg7[%c0_15, %c0_16] : memref<1x64xf32, #tpu.memory_space<vmem>>, vector<1x64xf32>
    %20 = vector.broadcast %19 : vector<1x64xf32> to vector<8x64xf32>
    %21 = arith.addf %18, %20 : vector<8x64xf32>
    %cst_17 = arith.constant 0.000000e+00 : f32
    %22 = vector.broadcast %cst_17 : f32 to vector<8x64xf32>
    %23 = arith.maximumf %21, %22 : vector<8x64xf32>
    %c0_18 = arith.constant 0 : index
    %c0_19 = arith.constant 0 : index
    %24 = vector.load %arg8[%c0_18, %c0_19] : memref<8x64xf32, #tpu.memory_space<vmem>>, vector<8x64xf32>
    tpu.vector_store %arg8[%c0_18, %c0_19], %23 {strides = array<i32>} : memref<8x64xf32, #tpu.memory_space<vmem>>, vector<8x64xf32>,
    return
  }
  func.func @transform_0(%arg0: i32) -> (i32, i32) {
    %c0_i32 = arith.constant 0 : i32
    %c0_i32_0 = arith.constant 0 : i32
    return %arg0, %c0_i32 : i32, i32
  }
  func.func @transform_1(%arg0: i32) -> (i32, i32) {
    %c0_i32 = arith.constant 0 : i32
    %c0_i32_0 = arith.constant 0 : i32
    %c0_i32_1 = arith.constant 0 : i32
    return %c0_i32, %c0_i32_0 : i32, i32
  }
  func.func @transform_2(%arg0: i32) -> (i32, i32) {
    %c0_i32 = arith.constant 0 : i32
    %c0_i32_0 = arith.constant 0 : i32
    %c0_i32_1 = arith.constant 0 : i32
    return %c0_i32, %c0_i32_0 : i32, i32
  }
  func.func @transform_3(%arg0: i32) -> (i32, i32) {
    %c0_i32 = arith.constant 0 : i32
    %c0_i32_0 = arith.constant 0 : i32
    %c0_i32_1 = arith.constant 0 : i32
    return %c0_i32, %c0_i32_0 : i32, i32
  }
  func.func @transform_4(%arg0: i32) -> (i32, i32) {
    %c0_i32 = arith.constant 0 : i32
    %c0_i32_0 = arith.constant 0 : i32
    %c0_i32_1 = arith.constant 0 : i32
    return %c0_i32, %c0_i32_0 : i32, i32
  }
  func.func @transform_5(%arg0: i32) -> (i32, i32) {
    %c0_i32 = arith.constant 0 : i32
    %c0_i32_0 = arith.constant 0 : i32
    %c0_i32_1 = arith.constant 0 : i32
    return %c0_i32, %c0_i32_0 : i32, i32
  }
  func.func @transform_6(%arg0: i32) -> (i32, i32) {
    %c0_i32 = arith.constant 0 : i32
    %c0_i32_0 = arith.constant 0 : i32
    %c0_i32_1 = arith.constant 0 : i32
    return %c0_i32, %c0_i32_0 : i32, i32
  }
  func.func @transform_7(%arg0: i32) -> (i32, i32) {
    %c0_i32 = arith.constant 0 : i32
    %c0_i32_0 = arith.constant 0 : i32
    return %arg0, %c0_i32 : i32, i32
  }
}

</mosaic_0001>

<llo_original>
// kernel: tpu_custom_call.1
$region0: #{tpu_custom_call.1}
  #allocation0 [shape = 'u32[]', space=smem, size = 0x4, offset = 0x4, fixed_abs, tag = 'smem constant byte address 0x4 - core index']
  #allocation1 [shape = 'u32[144,128]{1,0:T(1,128)}', space=vmem, size = 0x12000, scoped, tag = 'internal scratch']
  %s0 = inlined_call_operand.vmem [shape: bf16[8,12], index: 0, kind: input, shape index: {}]
  %s1 = inlined_call_operand.vmem [shape: bf16[12,128], index: 1, kind: input, shape index: {}]
  %s2 = inlined_call_operand.vmem [shape: f32[1,128], index: 2, kind: input, shape index: {}]
  %s3 = inlined_call_operand.vmem [shape: bf16[128,128], index: 3, kind: input, shape index: {}]
  %s4 = inlined_call_operand.vmem [shape: f32[1,128], index: 4, kind: input, shape index: {}]
  %s5 = inlined_call_operand.vmem [shape: bf16[128,64], index: 5, kind: input, shape index: {}]
  %s6 = inlined_call_operand.vmem [shape: f32[1,64], index: 6, kind: input, shape index: {}]
  %s7 = inlined_call_operand.hbm [shape: f32[8,64], index: 7, kind: output, shape index: {}]
  %s8 = sld [smem:[#allocation0]]
  $region38: #{tpu_custom_call.1} parent=0
    _
  %s10 = ssub.s32 1, %s8
  %s11 = scalar_select 0, %s10, %s8
  $region1: #{tpu_custom_call.1} parent=0
    #allocation2 [shape = 'u8[4096]{0}', space=vmem, size = 0x1000, scoped, tag = 'output window, operand 0, single buffered']
    #allocation3 [shape = 's32[1]{0}', space=sflag, size = 0x4, scoped, tag = 'scoped memory for tpu_custom_call.1']
    %12 = vsyncpa [#allocation3], 0
    // Predicated region
    $region2: #{tpu_custom_call.1} parent=1 // pred_check
      _
    $region3: #{tpu_custom_call.1} parent=1 // pred_check_branch
      %14 = sbr.rel (0) target = $region5
    $region4: #{tpu_custom_call.1} parent=1 // pred_region
      _
    $region5: #{tpu_custom_call.1} parent=1 // pred_fallthru
      _
    // Predicated region
    $region6: #{tpu_custom_call.1} parent=1 // pred_check
      _
    $region7: #{tpu_custom_call.1} parent=1 // pred_check_branch
      %16 = sbr.rel (0) target = $region9
    $region8: #{tpu_custom_call.1} parent=1 // pred_region
      _
    $region9: #{tpu_custom_call.1} parent=1 // pred_fallthru
      _
    // Predicated region
    $region10: #{tpu_custom_call.1} parent=1 // pred_check
      _
    $region11: #{tpu_custom_call.1} parent=1 // pred_check_branch
      %18 = sbr.rel (0) target = $region13
    $region12: #{tpu_custom_call.1} parent=1 // pred_region
      _
    $region13: #{tpu_custom_call.1} parent=1 // pred_fallthru
      _
    // Predicated region
    $region14: #{tpu_custom_call.1} parent=1 // pred_check
      _
    $region15: #{tpu_custom_call.1} parent=1 // pred_check_branch
      %20 = sbr.rel (0) target = $region17
    $region16: #{tpu_custom_call.1} parent=1 // pred_region
      _
    $region17: #{tpu_custom_call.1} parent=1 // pred_fallthru
      _
    // Predicated region
    $region18: #{tpu_custom_call.1} parent=1 // pred_check
      _
    $region19: #{tpu_custom_call.1} parent=1 // pred_check_branch
      %22 = sbr.rel (0) target = $region21
    $region20: #{tpu_custom_call.1} parent=1 // pred_region
      _
    $region21: #{tpu_custom_call.1} parent=1 // pred_fallthru
      _
    // Predicated region
    $region22: #{tpu_custom_call.1} parent=1 // pred_check
      _
    $region23: #{tpu_custom_call.1} parent=1 // pred_check_branch
      %24 = sbr.rel (0) target = $region25
    $region24: #{tpu_custom_call.1} parent=1 // pred_region
      _
    $region25: #{tpu_custom_call.1} parent=1 // pred_fallthru
      _
    // Predicated region
    $region26: #{tpu_custom_call.1} parent=1 // pred_check
      _
    $region27: #{tpu_custom_call.1} parent=1 // pred_check_branch
      %26 = sbr.rel (0) target = $region29
    $region28: #{tpu_custom_call.1} parent=1 // pred_region
      _
    $region29: #{tpu_custom_call.1} parent=1 // pred_fallthru
      _
    %v28 = vld [vmem:[%s0] sm:$0xf]
    %v29 = vld [vmem:[%s1] sm:$0xf]
    %v30 = vld [vmem:[%s1 + $0x4] sm:$0x3]
    %v31 = vld [vmem:[%s2] sm:$0x1]
    %v33 = vlaneseq
    %v34 = vshrl.u32 %v33, 7
    %v35 = vsub.s32 0, %v34
    %v36 = vrot.slane %v31, %v35
    %v40 = vunpack.c.l.b16 %v29
    %v41 = vunpack.c.l.b16 %v30
    %v42 = vpack.c.b16 %v41, %v40
    %vm43 = vcmask 97280
    %v45 = vsel %vm43, %v28, 0
    %vm47 = vcmask 1045504
    %v49 = vsel %vm47, %v42, 0
    %51 = vmatprep.subr.bf16.mxu0 0
    %52 = vmatpush1.bf16.msra.mxu0 %v49
    %53 = vmatprep.subr.bf16.mxu0 0
    %54 = vmatpush1.bf16.msra.mxu0 0
    %55 = vmatprep.subr.bf16.mxu0 0
    %56 = vmatpush1.bf16.msra.mxu0 0
    %57 = vmatprep.subr.bf16.mxu0 0
    %58 = vmatpush1.bf16.msra.mxu0 0
    %59 = vmatprep.subr.bf16.mxu0 0
    %60 = vmatpush1.bf16.msra.mxu0 0
    %61 = vmatprep.subr.bf16.mxu0 0
    %62 = vmatpush1.bf16.msra.mxu0 0
    %63 = vmatprep.subr.bf16.mxu0 0
    %64 = vmatpush1.bf16.msra.mxu0 0
    %65 = vmatprep.subr.bf16.mxu0 0
    %66 = vmatpush1.bf16.msra.mxu0 0
    %67 = vmatprep.subr.bf16.mxu0 0
    %68 = vmatpush1.bf16.msra.mxu0 0
    %69 = vmatprep.subr.bf16.mxu0 0
    %70 = vmatpush1.bf16.msra.mxu0 0
    %71 = vmatprep.subr.bf16.mxu0 0
    %72 = vmatpush1.bf16.msra.mxu0 0
    %73 = vmatprep.subr.bf16.mxu0 0
    %74 = vmatpush1.bf16.msra.mxu0 0
    %75 = vmatprep.subr.bf16.mxu0 0
    %76 = vmatpush1.bf16.msra.mxu0 0
    %77 = vmatprep.subr.bf16.mxu0 0
    %78 = vmatpush1.bf16.msra.mxu0 0
    %79 = vmatprep.subr.bf16.mxu0 0
    %80 = vmatpush1.bf16.msra.mxu0 0
    %81 = vmatprep.subr.bf16.mxu0 0
    %82 = vmatpush1.bf16.msra.mxu0 0
    %83 = vmatprep.mubr.bf16.mxu0 0
    %84 = vmatmul.mubr.bf16.gmra.mrb[0].mxu0 %v45
    %v85 = vpop.f32.mrb[0].mxu0
    %v86 = vadd.f32 %v36, %v85
    %v87 = vpop.f32.mrb[0].mxu0
    %v88 = vpop.f32.mrb[0].mxu0
    %v89 = vpop.f32.mrb[0].mxu0
    %90 = vdwg.mxu0
    %v91 = vmax.f32 %v86, 0.0
    %v92 = vpack.c.bf16 %v91, %v91
    %v93 = vld [vmem:[%s3] sm:$0xf]
    %v94 = vld [vmem:[%s3 + $0x4] sm:$0xf]
    %v95 = vld [vmem:[%s3 + $0x8] sm:$0xf]
    %v96 = vld [vmem:[%s3 + $0xc] sm:$0xf]
    %v97 = vld [vmem:[%s3 + $0x10] sm:$0xf]
    %v98 = vld [vmem:[%s3 + $0x14] sm:$0xf]
    %v99 = vld [vmem:[%s3 + $0x18] sm:$0xf]
    %v100 = vld [vmem:[%s3 + $0x1c] sm:$0xf]
    %v101 = vld [vmem:[%s3 + $0x20] sm:$0xf]
    %v102 = vld [vmem:[%s3 + $0x24] sm:$0xf]
    %v103 = vld [vmem:[%s3 + $0x28] sm:$0xf]
    %v104 = vld [vmem:[%s3 + $0x2c] sm:$0xf]
    %v105 = vld [vmem:[%s3 + $0x30] sm:$0xf]
    %v106 = vld [vmem:[%s3 + $0x34] sm:$0xf]
    %v107 = vld [vmem:[%s3 + $0x38] sm:$0xf]
    %v108 = vld [vmem:[%s3 + $0x3c] sm:$0xf]
    %v109 = vld [vmem:[%s4] sm:$0x1]
    %v111 = vlaneseq
    %v112 = vshrl.u32 %v111, 7
    %v113 = vsub.s32 0, %v112
    %v114 = vrot.slane %v109, %v113
    %v132 = vunpack.c.l.b16 %v93
    %v133 = vunpack.c.l.b16 %v94
    %v134 = vunpack.c.l.b16 %v95
    %v135 = vunpack.c.l.b16 %v96
    %v136 = vunpack.c.l.b16 %v97
    %v137 = vunpack.c.l.b16 %v98
    %v138 = vunpack.c.l.b16 %v99
    %v139 = vunpack.c.l.b16 %v100
    %v140 = vunpack.c.l.b16 %v101
    %v141 = vunpack.c.l.b16 %v102
    %v142 = vunpack.c.l.b16 %v103
    %v143 = vunpack.c.l.b16 %v104
    %v144 = vunpack.c.l.b16 %v105
    %v145 = vunpack.c.l.b16 %v106
    %v146 = vunpack.c.l.b16 %v107
    %v147 = vunpack.c.l.b16 %v108
    %v148 = vpack.c.b16 %v133, %v132
    %v149 = vpack.c.b16 %v135, %v134
    %v150 = vpack.c.b16 %v137, %v136
    %v151 = vpack.c.b16 %v139, %v138
    %v152 = vpack.c.b16 %v141, %v140
    %v153 = vpack.c.b16 %v143, %v142
    %v154 = vpack.c.b16 %v145, %v144
    %v155 = vpack.c.b16 %v147, %v146
    %164 = vmatprep.subr.bf16.mxu0 0
    %165 = vmatpush1.bf16.msra.mxu0 %v148
    %166 = vmatprep.subr.bf16.mxu0 0
    %167 = vmatpush1.bf16.msra.mxu0 %v149
    %168 = vmatprep.subr.bf16.mxu0 0
    %169 = vmatpush1.bf16.msra.mxu0 %v150
    %170 = vmatprep.subr.bf16.mxu0 0
    %171 = vmatpush1.bf16.msra.mxu0 %v151
    %172 = vmatprep.subr.bf16.mxu0 0
    %173 = vmatpush1.bf16.msra.mxu0 %v152
    %174 = vmatprep.subr.bf16.mxu0 0
    %175 = vmatpush1.bf16.msra.mxu0 %v153
    %176 = vmatprep.subr.bf16.mxu0 0
    %177 = vmatpush1.bf16.msra.mxu0 %v154
    %178 = vmatprep.subr.bf16.mxu0 0
    %179 = vmatpush1.bf16.msra.mxu0 %v155
    %180 = vmatprep.subr.bf16.mxu0 0
    %181 = vmatpush1.bf16.msra.mxu0 0
    %182 = vmatprep.subr.bf16.mxu0 0
    %183 = vmatpush1.bf16.msra.mxu0 0
    %184 = vmatprep.subr.bf16.mxu0 0
    %185 = vmatpush1.bf16.msra.mxu0 0
    %186 = vmatprep.subr.bf16.mxu0 0
    %187 = vmatpush1.bf16.msra.mxu0 0
    %188 = vmatprep.subr.bf16.mxu0 0
    %189 = vmatpush1.bf16.msra.mxu0 0
    %190 = vmatprep.subr.bf16.mxu0 0
    %191 = vmatpush1.bf16.msra.mxu0 0
    %192 = vmatprep.subr.bf16.mxu0 0
    %193 = vmatpush1.bf16.msra.mxu0 0
    %194 = vmatprep.subr.bf16.mxu0 0
    %195 = vmatpush1.bf16.msra.mxu0 0
    %196 = vmatprep.mubr.bf16.mxu0 0
    %197 = vmatmul.mubr.bf16.gmra.mrb[0].mxu0 %v92
    %v198 = vpop.f32.mrb[0].mxu0
    %v199 = vadd.f32 %v114, %v198
    %v200 = vpop.f32.mrb[0].mxu0
    %v201 = vpop.f32.mrb[0].mxu0
    %v202 = vpop.f32.mrb[0].mxu0
    %203 = vdwg.mxu0
    %v204 = vmax.f32 %v199, 0.0
    %v205 = vpack.c.bf16 %v204, %v204
    %v206 = vld [vmem:[%s5] sm:$0xf]
    %v207 = vld [vmem:[%s5 + $0x4] sm:$0xf]
    %v208 = vld [vmem:[%s5 + $0x8] sm:$0xf]
    %v209 = vld [vmem:[%s5 + $0xc] sm:$0xf]
    %v210 = vld [vmem:[%s5 + $0x10] sm:$0xf]
    %v211 = vld [vmem:[%s5 + $0x14] sm:$0xf]
    %v212 = vld [vmem:[%s5 + $0x18] sm:$0xf]
    %v213 = vld [vmem:[%s5 + $0x1c] sm:$0xf]
    %v214 = vld [vmem:[%s5 + $0x20] sm:$0xf]
    %v215 = vld [vmem:[%s5 + $0x24] sm:$0xf]
    %v216 = vld [vmem:[%s5 + $0x28] sm:$0xf]
    %v217 = vld [vmem:[%s5 + $0x2c] sm:$0xf]
    %v218 = vld [vmem:[%s5 + $0x30] sm:$0xf]
    %v219 = vld [vmem:[%s5 + $0x34] sm:$0xf]
    %v220 = vld [vmem:[%s5 + $0x38] sm:$0xf]
    %v221 = vld [vmem:[%s5 + $0x3c] sm:$0xf]
    %v222 = vld [vmem:[%s6] sm:$0x1]
    %v224 = vlaneseq
    %v225 = vshrl.u32 %v224, 7
    %v226 = vsub.s32 0, %v225
    %v227 = vrot.slane %v222, %v226
    %v245 = vunpack.c.l.b16 %v206
    %v246 = vunpack.c.l.b16 %v207
    %v247 = vunpack.c.l.b16 %v208
    %v248 = vunpack.c.l.b16 %v209
    %v249 = vunpack.c.l.b16 %v210
    %v250 = vunpack.c.l.b16 %v211
    %v251 = vunpack.c.l.b16 %v212
    %v252 = vunpack.c.l.b16 %v213
    %v253 = vunpack.c.l.b16 %v214
    %v254 = vunpack.c.l.b16 %v215
    %v255 = vunpack.c.l.b16 %v216
    %v256 = vunpack.c.l.b16 %v217
    %v257 = vunpack.c.l.b16 %v218
    %v258 = vunpack.c.l.b16 %v219
    %v259 = vunpack.c.l.b16 %v220
    %v260 = vunpack.c.l.b16 %v221
    %v261 = vpack.c.b16 %v246, %v245
    %v262 = vpack.c.b16 %v248, %v247
    %v263 = vpack.c.b16 %v250, %v249
    %v264 = vpack.c.b16 %v252, %v251
    %v265 = vpack.c.b16 %v254, %v253
    %v266 = vpack.c.b16 %v256, %v255
    %v267 = vpack.c.b16 %v258, %v257
    %v268 = vpack.c.b16 %v260, %v259
    %277 = vmatprep.subr.bf16.mxu0 0
    %278 = vmatpush1.bf16.msra.mxu0 %v261
    %279 = vmatprep.subr.bf16.mxu0 0
    %280 = vmatpush1.bf16.msra.mxu0 %v262
    %281 = vmatprep.subr.bf16.mxu0 0
    %282 = vmatpush1.bf16.msra.mxu0 %v263
    %283 = vmatprep.subr.bf16.mxu0 0
    %284 = vmatpush1.bf16.msra.mxu0 %v264
    %285 = vmatprep.subr.bf16.mxu0 0
    %286 = vmatpush1.bf16.msra.mxu0 %v265
    %287 = vmatprep.subr.bf16.mxu0 0
    %288 = vmatpush1.bf16.msra.mxu0 %v266
    %289 = vmatprep.subr.bf16.mxu0 0
    %290 = vmatpush1.bf16.msra.mxu0 %v267
    %291 = vmatprep.subr.bf16.mxu0 0
    %292 = vmatpush1.bf16.msra.mxu0 %v268
    %293 = vmatprep.subr.bf16.mxu0 0
    %294 = vmatpush1.bf16.msra.mxu0 0
    %295 = vmatprep.subr.bf16.mxu0 0
    %296 = vmatpush1.bf16.msra.mxu0 0
    %297 = vmatprep.subr.bf16.mxu0 0
    %298 = vmatpush1.bf16.msra.mxu0 0
    %299 = vmatprep.subr.bf16.mxu0 0
    %300 = vmatpush1.bf16.msra.mxu0 0
    %301 = vmatprep.subr.bf16.mxu0 0
    %302 = vmatpush1.bf16.msra.mxu0 0
    %303 = vmatprep.subr.bf16.mxu0 0
    %304 = vmatpush1.bf16.msra.mxu0 0
    %305 = vmatprep.subr.bf16.mxu0 0
    %306 = vmatpush1.bf16.msra.mxu0 0
    %307 = vmatprep.subr.bf16.mxu0 0
    %308 = vmatpush1.bf16.msra.mxu0 0
    %309 = vmatprep.mubr.bf16.mxu0 0
    %310 = vmatmul.mubr.bf16.gmra.mrb[0].mxu0 %v205
    %v311 = vpop.f32.mrb[0].mxu0
    %v312 = vadd.f32 %v227, %v311
    %v313 = vpop.f32.mrb[0].mxu0
    %v314 = vpop.f32.mrb[0].mxu0
    %v315 = vpop.f32.mrb[0].mxu0
    %316 = vdwg.mxu0
    %v317 = vmax.f32 %v312, 0.0
    %vm318 = vcmask 523264
    %319 = vst.msk [vmem:[#allocation2] sm:$0xff] %vm318, %v317
    // Predicated region
    $region30: #{tpu_custom_call.1} parent=1 // pred_check
      _
    $region31: #{tpu_custom_call.1} parent=1 // pred_check_branch
      %321 = sbr.rel (0) target = $region33
    $region32: #{tpu_custom_call.1} parent=1 // pred_region
      %s323 = ssub.s32 128, 128
      %324 = vsyncadd [#allocation3], %s323
      %s326 = sshll.u32 [#allocation2], 4
      %s327 = int_to_ptr.vmem [resolvable:$true] %s326
      %329 = dma.vmem_to_hbm [thread:$0]  %s327, 128, %s7, [#allocation3]
    $region33: #{tpu_custom_call.1} parent=1 // pred_fallthru
      _
    // Predicated region
    $region34: #{tpu_custom_call.1} parent=1 // pred_check
      _
    $region35: #{tpu_custom_call.1} parent=1 // pred_check_branch
      %331 = sbr.rel (0) target = $region37
    $region36: #{tpu_custom_call.1} parent=1 // pred_region
      %332 = dma.done [#allocation3], 128
    $region37: #{tpu_custom_call.1} parent=1 // pred_fallthru
      _
    %333 = vsyncpa [#allocation3], 1

</llo_original>
